<compile_context>
chip_gen: v7x
topology: tpu7x:2x2x1
jax: 0.10.0
libtpu: 0.0.40
codegen_flags: <defaults>
</compile_context>

<pallas_src>
import functools
import numpy as np
import jax
import jax.numpy as jnp
from jax.experimental import pallas as pl
from jax.experimental.pallas import tpu as pltpu


def _round_up(v, m):
    return (v + m - 1) // m * m


def _ldam_tile_kernel(x_ref, side_ref, out_ref, *, s, n_rows):
    # x_ref: (TM, C) logits, native dtype; cast to f32 in-register.
    x = x_ref[...].astype(jnp.float32)
    side = side_ref[...]                       # (TM, 3) f32: [target, zt, wt]
    tgt = side[:, 0:1].astype(jnp.int32)       # (TM, 1) label (exact for C < 2^24)
    zt = side[:, 1:2]                          # (TM, 1) = s * (x[row, tgt] - m[tgt])
    wt = side[:, 2:3]                          # (TM, 1) = weight[tgt]

    tm, c = x.shape
    col = jax.lax.broadcasted_iota(jnp.int32, (tm, c), 1)

    # torch: output = where(onehot, x - batch_m, x); z = s * output
    # Single select: target lane gets zt (= s*(x_t - m)), others get s*x.
    z = jnp.where(col == tgt, zt, s * x)

    # Row-wise logsumexp (the only cross-lane reductions in the kernel).
    zmax = jnp.max(z, axis=1, keepdims=True)
    sumexp = jnp.sum(jnp.exp(z - zmax), axis=1, keepdims=True)
    lse = jnp.log(sumexp) + zmax
    nll = lse - zt                             # (TM, 1)

    # Mask rows past the true batch size (partial last tile) via select.
    row = jax.lax.broadcasted_iota(jnp.int32, (tm, 1), 0)
    valid = (pl.program_id(0) * tm + row) < n_rows
    num = jnp.sum(jnp.where(valid, wt * nll, 0.0))   # weighted-NLL partial
    den = jnp.sum(jnp.where(valid, wt, 0.0))         # weight partial

    # Lane-dense (1,8,128) output block: lane 0 = num, lane 1 = den, rest 0.
    lane = jax.lax.broadcasted_iota(jnp.int32, (1, 8, 128), 2)
    out_ref[...] = jnp.where(lane == 0, num, jnp.where(lane == 1, den, 0.0))


def _choose_tm(n, c, itemsize, tile_budget, mult):
    row_bytes = max(1, c * itemsize)
    tm = tile_budget // row_bytes
    tm = min(tm, 4096)                                       # big tiles for small C
    # Keep >= ~8 grid steps so the 'parallel' axis can split across v7x's 2 TCs.
    tm = min(tm, max(mult, _round_up(pl.cdiv(n, 8), mult)))
    tm = max(mult, (tm // mult) * mult)
    return int(tm)


def ldam_loss(x, target, m_list, s=30.0, weight=None, tm=None):
    """LDAM loss. x: (N, C) logits (native dtype); target: (N,) int labels;
    m_list: (C,) margins; weight: optional (C,) CE class weights."""
    n, c = x.shape
    s = float(s)
    m_list = m_list.astype(jnp.float32)
    if weight is None:
        weight = jnp.ones((c,), jnp.float32)
    weight = weight.astype(jnp.float32)
    tgt = target.astype(jnp.int32)

    # Tiny O(N) per-row gathers done once in XLA; packed into one side array.
    bm = m_list[tgt]                                                    # (N,)
    wt = weight[tgt]                                                    # (N,)
    x_t = jnp.take_along_axis(x, tgt[:, None], axis=1)[:, 0].astype(jnp.float32)
    zt = s * (x_t - bm)                                                 # (N,)
    side = jnp.stack([tgt.astype(jnp.float32), zt, wt], axis=1)         # (N, 3) f32

    itemsize = jnp.dtype(x.dtype).itemsize
    mult = 8 if itemsize >= 4 else (16 if itemsize == 2 else 32)        # sublane min-tile

    # Generation-aware VMEM budgets (v7x: 64 MiB physical; v5e/v6e: 128 MiB).
    try:
        phys_vmem = int(pltpu.get_tpu_info().vmem_capacity_bytes)
    except Exception:
        phys_vmem = 64 * 2**20  # conservative fallback (v7x-safe everywhere)
    if phys_vmem <= 64 * 2**20:
        scoped_cap = 44 * 2**20
        tile_budget = 10 * 2**20
    else:
        scoped_cap = 64 * 2**20
        tile_budget = 16 * 2**20

    if tm is None:
        tm = _choose_tm(n, c, itemsize, tile_budget, mult)
    tm = max(mult, (int(tm) // mult) * mult)
    tm = min(tm, _round_up(n, mult))           # never bigger than the (rounded) batch
    num_tiles = int(pl.cdiv(n, tm))

    tile_bytes = tm * c * itemsize
    vmem_limit = int(min(scoped_cap, max(32 * 2**20, 2 * tile_bytes + 8 * 2**20)))

    out = pl.pallas_call(
        functools.partial(_ldam_tile_kernel, s=s, n_rows=n),
        out_shape=jax.ShapeDtypeStruct((num_tiles, 8, 128), jnp.float32),
        grid=(num_tiles,),
        in_specs=[
            pl.BlockSpec((tm, c), lambda i: (i, 0)),   # logits tile, native dtype
            pl.BlockSpec((tm, 3), lambda i: (i, 0)),   # packed [tgt, zt, wt]
        ],
        out_specs=pl.BlockSpec((1, 8, 128), lambda i: (i, 0, 0)),
        compiler_params=pltpu.CompilerParams(
            dimension_semantics=("parallel",),
            vmem_limit_bytes=vmem_limit,
        ),
        cost_estimate=pl.CostEstimate(
            flops=6 * n * c,
            transcendentals=n * c + n,
            bytes_accessed=n * c * itemsize + 3 * 4 * n + 4 * num_tiles * 8 * 128,
        ),
    )(x, side)

    num_total = jnp.sum(out[:, 0, 0])
    den_total = jnp.sum(out[:, 0, 1])
    # NOTE: if sum(weight[target]) == 0 this is NaN (same as PyTorch).
    return num_total / den_total


def make_m_list(cls_num_list, max_m=0.5):
    m = 1.0 / np.sqrt(np.sqrt(np.asarray(cls_num_list, dtype=np.float64)))
    m = m * (max_m / np.max(m))
    return jnp.asarray(m, jnp.float32)


def _reference(x, target, m_list, s=30.0, weight=None):
    x = x.astype(jnp.float32)
    n, c = x.shape
    onehot = jax.nn.one_hot(target, c, dtype=jnp.float32)
    batch_m = (onehot * m_list[None, :]).sum(axis=1, keepdims=True)
    out = jnp.where(onehot.astype(bool), x - batch_m, x)
    z = s * out
    logp = jax.nn.log_softmax(z, axis=1)
    nll = -(onehot * logp).sum(axis=1)
    if weight is None:
        weight = jnp.ones((c,), jnp.float32)
    w_t = weight[target]
    return jnp.sum(w_t * nll) / jnp.sum(w_t)


if __name__ == "__main__":
    key = jax.random.PRNGKey(0)
    kx, kt, kw, kx2, kt2, kx3, kt3 = jax.random.split(key, 7)

    # Test 1: small f32 single-tile case, unweighted CE.
    N, C = 8, 16
    cls_num_list = [100, 80, 60, 50, 40, 30, 25, 20, 15, 12, 10, 8, 6, 5, 4, 2]
    m_list = make_m_list(cls_num_list, max_m=0.5)
    x = jax.random.normal(kx, (N, C), dtype=jnp.float32)
    target = jax.random.randint(kt, (N,), 0, C, dtype=jnp.int32)
    loss = jax.block_until_ready(ldam_loss(x, target, m_list, s=30.0))
    ref = _reference(x, target, m_list, s=30.0)
    assert np.allclose(np.asarray(loss), np.asarray(ref), rtol=1e-5, atol=1e-5), (
        float(loss), float(ref))

    # Test 2: multi-tile grid with a partial last tile (300 % 128 != 0),
    # class weights, explicit tile size.
    N2, C2 = 300, 40
    m_list2 = make_m_list(np.linspace(200, 5, C2), max_m=0.5)
    w2 = jax.random.uniform(kw, (C2,), minval=0.5, maxval=1.5, dtype=jnp.float32)
    x2 = jax.random.normal(kx2, (N2, C2), dtype=jnp.float32)
    t2 = jax.random.randint(kt2, (N2,), 0, C2, dtype=jnp.int32)
    loss2 = jax.block_until_ready(ldam_loss(x2, t2, m_list2, s=30.0, weight=w2, tm=128))
    ref2 = _reference(x2, t2, m_list2, s=30.0, weight=w2)
    assert np.allclose(np.asarray(loss2), np.asarray(ref2), rtol=1e-4, atol=1e-5), (
        float(loss2), float(ref2))

    # Test 3: bf16 logits streamed in native dtype, auto tile size.
    N3, C3 = 300, 40
    x3 = jax.random.normal(kx3, (N3, C3), dtype=jnp.float32).astype(jnp.bfloat16)
    t3 = jax.random.randint(kt3, (N3,), 0, C3, dtype=jnp.int32)
    loss3 = jax.block_until_ready(ldam_loss(x3, t3, m_list2, s=30.0, weight=w2))
    ref3 = _reference(x3, t3, m_list2, s=30.0, weight=w2)
    assert np.allclose(np.asarray(loss3), np.asarray(ref3), rtol=1e-4, atol=1e-4), (
        float(loss3), float(ref3))

    print("KERNEL_OK")
</pallas_src>

<mosaic_0001>
module attributes {stable_mosaic.version = 11 : i64} {
  func.func @_ldam_tile_kernel(%arg0: i32, %arg1: memref<8x16xf32, #tpu.memory_space<vmem>>, %arg2: memref<8x3xf32, #tpu.memory_space<vmem>>, %arg3: memref<1x8x128xf32, #tpu.memory_space<vmem>>) attributes {dimension_semantics = [#tpu.dimension_semantics<parallel>], iteration_bounds = array<i64: 1>, scalar_prefetch = 0 : i64, scratch_operands = 0 : i64, tpu.core_type = #tpu.core_type<tc>, window_params = [{transform_indices = @transform_0, window_bounds = array<i64: 8, 16>}, {transform_indices = @transform_1, window_bounds = array<i64: 8, 3>}, {transform_indices = @transform_2, window_bounds = array<i64: 1, 8, 128>}]} {
    %c0 = arith.constant 0 : index
    %c0_0 = arith.constant 0 : index
    %0 = vector.load %arg1[%c0, %c0_0] : memref<8x16xf32, #tpu.memory_space<vmem>>, vector<8x16xf32>
    %c0_1 = arith.constant 0 : index
    %c0_2 = arith.constant 0 : index
    %1 = vector.load %arg2[%c0_1, %c0_2] : memref<8x3xf32, #tpu.memory_space<vmem>>, vector<8x3xf32>
    %2 = vector.extract_strided_slice %1 {offsets = [0, 0], sizes = [8, 1], strides = [1, 1]} : vector<8x3xf32> to vector<8x1xf32>
    %3 = arith.fptosi %2 : vector<8x1xf32> to vector<8x1xi32>
    %4 = vector.extract_strided_slice %1 {offsets = [0, 1], sizes = [8, 1], strides = [1, 1]} : vector<8x3xf32> to vector<8x1xf32>
    %5 = vector.extract_strided_slice %1 {offsets = [0, 2], sizes = [8, 1], strides = [1, 1]} : vector<8x3xf32> to vector<8x1xf32>
    %6 = tpu.iota {dimensions = array<i32: 1>} : vector<8x16xi32>
    %7 = vector.broadcast %3 : vector<8x1xi32> to vector<8x16xi32>
    %8 = arith.cmpi eq, %6, %7 : vector<8x16xi32>
    %cst = arith.constant 3.000000e+01 : f32
    %9 = vector.broadcast %cst : f32 to vector<8x16xf32>
    %10 = arith.mulf %9, %0 : vector<8x16xf32>
    %11 = vector.shape_cast %4 : vector<8x1xf32> to vector<8x1xf32>
    %12 = vector.broadcast %11 : vector<8x1xf32> to vector<8x16xf32>
    %13 = arith.select %8, %12, %10 : vector<8x16xi1>, vector<8x16xf32>
    %cst_3 = arith.constant dense<0xFF800000> : vector<8xf32>
    %14 = vector.multi_reduction <maximumf>, %13, %cst_3 [1] : vector<8x16xf32> to vector<8xf32>
    %15 = vector.shape_cast %14 : vector<8xf32> to vector<8x1xf32>
    %16 = vector.broadcast %15 : vector<8x1xf32> to vector<8x16xf32>
    %17 = arith.subf %13, %16 : vector<8x16xf32>
    %18 = math.exp %17 : vector<8x16xf32>
    %cst_4 = arith.constant dense<0.000000e+00> : vector<8xf32>
    %19 = vector.multi_reduction <add>, %18, %cst_4 [1] : vector<8x16xf32> to vector<8xf32>
    %20 = vector.shape_cast %19 : vector<8xf32> to vector<8x1xf32>
    %21 = math.log %20 : vector<8x1xf32>
    %22 = arith.addf %21, %15 : vector<8x1xf32>
    %23 = arith.subf %22, %4 : vector<8x1xf32>
    %24 = tpu.iota {dimensions = array<i32: 0>} : vector<8x1xi32>
    %c8_i32 = arith.constant 8 : i32
    %25 = arith.muli %arg0, %c8_i32 : i32
    %26 = vector.broadcast %25 : i32 to vector<8x1xi32>
    %27 = arith.addi %26, %24 : vector<8x1xi32>
    %c8_i32_5 = arith.constant 8 : i32
    %28 = vector.broadcast %c8_i32_5 : i32 to vector<8x1xi32>
    %29 = arith.cmpi slt, %27, %28 : vector<8x1xi32>
    %30 = arith.mulf %5, %23 : vector<8x1xf32>
    %cst_6 = arith.constant 0.000000e+00 : f32
    %31 = vector.broadcast %cst_6 : f32 to vector<8x1xf32>
    %32 = arith.select %29, %30, %31 : vector<8x1xi1>, vector<8x1xf32>
    %33 = vector.shape_cast %32 : vector<8x1xf32> to vector<1x8x1xf32>
    %cst_7 = arith.constant dense<0.000000e+00> : vector<1xf32>
    %34 = vector.multi_reduction <add>, %33, %cst_7 [1, 2] : vector<1x8x1xf32> to vector<1xf32>
    %35 = vector.shape_cast %34 : vector<1xf32> to vector<1x1x1xf32>
    %36 = vector.extract %35[0, 0, 0] : f32 from vector<1x1x1xf32>
    %cst_8 = arith.constant 0.000000e+00 : f32
    %37 = vector.broadcast %cst_8 : f32 to vector<8x1xf32>
    %38 = arith.select %29, %5, %37 : vector<8x1xi1>, vector<8x1xf32>
    %39 = vector.shape_cast %38 : vector<8x1xf32> to vector<1x8x1xf32>
    %cst_9 = arith.constant dense<0.000000e+00> : vector<1xf32>
    %40 = vector.multi_reduction <add>, %39, %cst_9 [1, 2] : vector<1x8x1xf32> to vector<1xf32>
    %41 = vector.shape_cast %40 : vector<1xf32> to vector<1x1x1xf32>
    %42 = vector.extract %41[0, 0, 0] : f32 from vector<1x1x1xf32>
    %43 = tpu.iota {dimensions = array<i32: 2>} : vector<1x8x128xi32>
    %c0_i32 = arith.constant 0 : i32
    %44 = vector.broadcast %c0_i32 : i32 to vector<1x8x128xi32>
    %45 = arith.cmpi eq, %43, %44 : vector<1x8x128xi32>
    %c1_i32 = arith.constant 1 : i32
    %46 = vector.broadcast %c1_i32 : i32 to vector<1x8x128xi32>
    %47 = arith.cmpi eq, %43, %46 : vector<1x8x128xi32>
    %cst_10 = arith.constant 0.000000e+00 : f32
    %48 = vector.broadcast %42 : f32 to vector<1x8x128xf32>
    %49 = vector.broadcast %cst_10 : f32 to vector<1x8x128xf32>
    %50 = arith.select %47, %48, %49 : vector<1x8x128xi1>, vector<1x8x128xf32>
    %51 = vector.broadcast %36 : f32 to vector<1x8x128xf32>
    %52 = arith.select %45, %51, %50 : vector<1x8x128xi1>, vector<1x8x128xf32>
    %c0_11 = arith.constant 0 : index
    %c0_12 = arith.constant 0 : index
    %c0_13 = arith.constant 0 : index
    %53 = vector.load %arg3[%c0_11, %c0_12, %c0_13] : memref<1x8x128xf32, #tpu.memory_space<vmem>>, vector<1x8x128xf32>
    tpu.vector_store %arg3[%c0_11, %c0_12, %c0_13], %52 {strides = array<i32>} : memref<1x8x128xf32, #tpu.memory_space<vmem>>, vector<1x8x128xf32>,
    return
  }
  func.func @transform_0(%arg0: i32) -> (i32, i32) {
    %c0_i32 = arith.constant 0 : i32
    %c0_i32_0 = arith.constant 0 : i32
    return %arg0, %c0_i32 : i32, i32
  }
  func.func @transform_1(%arg0: i32) -> (i32, i32) {
    %c0_i32 = arith.constant 0 : i32
    %c0_i32_0 = arith.constant 0 : i32
    return %arg0, %c0_i32 : i32, i32
  }
  func.func @transform_2(%arg0: i32) -> (i32, i32, i32) {
    %c0_i32 = arith.constant 0 : i32
    %c0_i32_0 = arith.constant 0 : i32
    %c0_i32_1 = arith.constant 0 : i32
    return %arg0, %c0_i32, %c0_i32_0 : i32, i32, i32
  }
}

</mosaic_0001>

<llo_original>
// kernel: tpu_custom_call.1
$region0: #{tpu_custom_call.1}
  #allocation0 [shape = 'u32[]', space=smem, size = 0x4, offset = 0x4, fixed_abs, tag = 'smem constant byte address 0x4 - core index']
  #allocation1 [shape = 'u32[144,128]{1,0:T(1,128)}', space=vmem, size = 0x12000, scoped, tag = 'internal scratch']
  %s0 = inlined_call_operand.vmem [shape: f32[8,16], index: 0, kind: input, shape index: {}]
  %s1 = inlined_call_operand.vmem [shape: f32[8,3], index: 1, kind: input, shape index: {}]
  %s2 = inlined_call_operand.hbm [shape: f32[1,8,128], index: 2, kind: output, shape index: {}]
  %s3 = sld [smem:[#allocation0]]
  $region18: #{tpu_custom_call.1} parent=0
    _
  %s5 = ssub.s32 1, %s3
  %s6 = scalar_select 0, %s5, %s3
  $region1: #{tpu_custom_call.1} parent=0
    #allocation2 [shape = 'u8[4096]{0}', space=vmem, size = 0x1000, scoped, tag = 'output window, operand 0, single buffered']
    #allocation3 [shape = 's32[1]{0}', space=sflag, size = 0x4, scoped, tag = 'scoped memory for tpu_custom_call.1']
    %7 = vsyncpa [#allocation3], 0
    // Predicated region
    $region2: #{tpu_custom_call.1} parent=1 // pred_check
      _
    $region3: #{tpu_custom_call.1} parent=1 // pred_check_branch
      %9 = sbr.rel (0) target = $region5
    $region4: #{tpu_custom_call.1} parent=1 // pred_region
      _
    $region5: #{tpu_custom_call.1} parent=1 // pred_fallthru
      _
    // Predicated region
    $region6: #{tpu_custom_call.1} parent=1 // pred_check
      _
    $region7: #{tpu_custom_call.1} parent=1 // pred_check_branch
      %11 = sbr.rel (0) target = $region9
    $region8: #{tpu_custom_call.1} parent=1 // pred_region
      _
    $region9: #{tpu_custom_call.1} parent=1 // pred_fallthru
      _
    %v12 = vld [vmem:[%s0] sm:$0xff]
    %v13 = vld [vmem:[%s1] sm:$0xff]
    %v14 = vcvt.f32.s32.to.zero.pseudo %v13
    %v15 = vlaneseq
    %v16 = vand.u32 %v15, 127
    %17 = vset.pattern.permute.xlu0 0
    %18 = vperm.xlu0 %17, %v14
    %v19 = vpop.permute.xlu0 %18
    %vm20 = vcmp.eq.s32.totalorder %v16, %v19
    %v21 = vmul.f32 %v12, 30.0
    %23 = vset.pattern.permute.xlu0 1
    %24 = vperm.xlu0 %23, %v13
    %v25 = vpop.permute.xlu0 %24
    %v27 = vsel %vm20, %v25, %v21
    %vm28 = vcmask 130048
    %v29 = vsel %vm28, %v27, -inf
    %30 = vmax.xlane.f32.xlu0 %v29
    %v31 = vpop.xlane.xlu0 %30
    %v32 = vsub.f32 %v27, %v31
    %v33 = vmul.f32 %v32, 1.442695
    %v34 = vpow.pop %v33
    %v35 = vsel %vm28, %v34, 0.0
    %36 = vadd.xlane.f32.xlu0 %v35
    %v37 = vpop.xlane.xlu0 %36
    %v38 = vlog2.pop %v37
    %v39 = vmul.f32 %v38, 0.6931472
    %v40 = vadd.f32 %v39, %v31
    %v41 = vsub.f32 %v40, %v13
    %v42 = vlaneseq
    %v43 = vshrl.u32 %v42, 7
    %s44 = smul.u32 0, 8
    %v45 = vstv %s44
    %v46 = vadd.s32 %v45, %v43
    %vm47 = vcmp.lt.s32.totalorder %v46, 8
    %49 = vrot.lane.b32.xlu0 %v41, 1
    %v50 = vpop.permute.xlu0 %49
    %v52 = vmul.f32 %v13, %v50
    %v53 = vsel %vm47, %v52, 0.0
    %55 = vrot.lane.b32.xlu0 %v53, 126
    %v56 = vpop.permute.xlu0 %55
    %vm58 = vcmask 7168
    %v59 = vsel %vm58, %v56, 0.0
    %60 = vadd.xlane.f32.xlu0 %v59
    %v61 = vpop.xlane.xlu0 %60
    %v62 = vrot.slane %v61, 4
    %v63 = vadd.f32 %v61, %v62
    %v64 = vrot.slane %v63, 2
    %v65 = vadd.f32 %v63, %v64
    %v66 = vrot.slane %v65, 1
    %v67 = vadd.f32 %v65, %v66
    %s68 = vtos %v67
    %v69 = vsel %vm47, %v13, 0.0
    %71 = vrot.lane.b32.xlu0 %v69, 126
    %v72 = vpop.permute.xlu0 %71
    %v74 = vsel %vm58, %v72, 0.0
    %75 = vadd.xlane.f32.xlu0 %v74
    %v76 = vpop.xlane.xlu0 %75
    %v77 = vrot.slane %v76, 4
    %v78 = vadd.f32 %v76, %v77
    %v79 = vrot.slane %v78, 2
    %v80 = vadd.f32 %v78, %v79
    %v81 = vrot.slane %v80, 1
    %v82 = vadd.f32 %v80, %v81
    %s83 = vtos %v82
    %vm84 = vcmp.eq.s32.totalorder %v16, 0
    %vm85 = vcmp.eq.s32.totalorder %v16, 1
    %v86 = vstv %s83
    %v87 = vsel %vm85, %v86, 0.0
    %v88 = vstv %s68
    %v89 = vsel %vm84, %v88, %v87
    %90 = vst [vmem:[#allocation2] sm:$0xff] %v89
    // Predicated region
    $region10: #{tpu_custom_call.1} parent=1 // pred_check
      _
    $region11: #{tpu_custom_call.1} parent=1 // pred_check_branch
      %92 = sbr.rel (0) target = $region13
    $region12: #{tpu_custom_call.1} parent=1 // pred_region
      %s94 = ssub.s32 128, 128
      %95 = vsyncadd [#allocation3], %s94
      %s97 = sshll.u32 [#allocation2], 4
      %s98 = int_to_ptr.vmem [resolvable:$true] %s97
      %100 = dma.vmem_to_hbm [thread:$0]  %s98, 128, %s2, [#allocation3]
    $region13: #{tpu_custom_call.1} parent=1 // pred_fallthru
      _
    // Predicated region
    $region14: #{tpu_custom_call.1} parent=1 // pred_check
      _
    $region15: #{tpu_custom_call.1} parent=1 // pred_check_branch
      %102 = sbr.rel (0) target = $region17
    $region16: #{tpu_custom_call.1} parent=1 // pred_region
      %103 = dma.done [#allocation3], 128
    $region17: #{tpu_custom_call.1} parent=1 // pred_fallthru
      _
    %104 = vsyncpa [#allocation3], 1

</llo_original>
